<compile_context>
chip_gen: v7x
topology: tpu7x:2x2x1
jax: 0.10.0
libtpu: 0.0.40
codegen_flags: <defaults>
</compile_context>

<pallas_src>
import functools

import jax
import jax.numpy as jnp
from jax.experimental import pallas as pl
from jax.experimental.pallas import tpu as pltpu

_LANE = 128
_SUBLANE = 8
_NEG_INF = -1e30


def _round_up(n, m):
    return ((n + m - 1) // m) * m


def _mlp_kernel(*refs, num_layers, negative_slope):
    # refs = (x_ref, w0, b0, w1, b1, ..., w_{L-1}, b_{L-1}, out_ref)
    x_ref = refs[0]
    out_ref = refs[-1]
    wb_refs = refs[1:-1]

    h = x_ref[...]  # bf16 (TILE_B, in_p)
    for i in range(num_layers):
        w = wb_refs[2 * i][...]          # bf16 (in_p, out_p) -- resident
        b = wb_refs[2 * i + 1][...]      # f32  (1, out_p)
        # bf16 operands feed the MXU, accumulation stays f32.
        acc = jnp.dot(h, w, preferred_element_type=jnp.float32) + b
        if i < num_layers - 1:
            # leaky_relu in f32 (VPU), then back to bf16 for the next matmul.
            acc = jnp.where(acc > 0, acc, negative_slope * acc)
            h = acc.astype(jnp.bfloat16)
        else:
            h = acc                      # f32 logits (padded lanes ~ -1e30)

    # Numerically stable softmax over the (lane-dense, padded) last axis.
    # Padded lanes carry a -1e30 bias -> exp underflows to exactly 0.
    m = jnp.max(h, axis=-1, keepdims=True)
    e = jnp.exp(h - m)
    denom = jnp.sum(e, axis=-1, keepdims=True)
    inv = pl.reciprocal(denom, approx=True)   # EUP slot, frees VALU
    out_ref[...] = (e * inv).astype(out_ref.dtype)


def linear_model_forward(x, weights, biases, negative_slope=0.2):
    """x: (batch, input_dim). weights[i]: (in_dim, out_dim). biases[i]: (out_dim,)."""
    num_layers = len(weights)
    batch, input_dim = x.shape
    out_dim = weights[-1].shape[1]
    out_dtype = x.dtype

    # ---- pad every feature dim up to a multiple of 128 (lane-dense) --------
    dims = [input_dim] + [w.shape[1] for w in weights]
    dims_p = [_round_up(d, _LANE) for d in dims]

    params = []
    for i, (w, b) in enumerate(zip(weights, biases)):
        in_p, out_p = dims_p[i], dims_p[i + 1]
        w_p = jnp.zeros((in_p, out_p), jnp.bfloat16)
        w_p = w_p.at[: w.shape[0], : w.shape[1]].set(w.astype(jnp.bfloat16))
        # Hidden layers: pad bias with 0 (leaky_relu(0)=0, zero W rows downstream).
        # Final layer: pad bias with -1e30 so padded logits vanish in softmax.
        fill = 0.0 if i < num_layers - 1 else _NEG_INF
        b_p = jnp.full((1, out_p), fill, jnp.float32)
        b_p = b_p.at[0, : b.shape[0]].set(b.astype(jnp.float32))
        params.append(w_p)
        params.append(b_p)

    in_p = dims_p[0]
    out_p = dims_p[-1]

    # ---- pad / tile the batch dimension ------------------------------------
    tile_b = min(256, _round_up(batch, _SUBLANE))   # fill MXU M axis at scale
    batch_p = _round_up(batch, tile_b)
    x_p = jnp.zeros((batch_p, in_p), jnp.bfloat16)
    x_p = x_p.at[:batch, :input_dim].set(x.astype(jnp.bfloat16))

    grid = (pl.cdiv(batch_p, tile_b),)

    in_specs = [pl.BlockSpec((tile_b, in_p), lambda i: (i, 0))]
    for p in params:
        # Full-shape blocks with a constant index_map: DMA'd once, stay resident.
        in_specs.append(pl.BlockSpec(p.shape, lambda i: (0, 0)))
    out_specs = pl.BlockSpec((tile_b, out_p), lambda i: (i, 0))

    # ---- explicit VMEM budget (safe on v7x's 64 MiB) ------------------------
    param_bytes = sum(int(p.size) * p.dtype.itemsize for p in params)
    x_tile_bytes = tile_b * in_p * 2
    out_tile_bytes = tile_b * out_p * 4
    act_bytes = tile_b * max(dims_p) * 4 * 4          # rough temp headroom
    footprint = param_bytes + 2 * (x_tile_bytes + out_tile_bytes) + act_bytes
    vmem_limit = int(min(max(2 * footprint, 16 << 20), 48 << 20))

    kernel = functools.partial(
        _mlp_kernel, num_layers=num_layers, negative_slope=negative_slope
    )

    out_p_arr = pl.pallas_call(
        kernel,
        out_shape=jax.ShapeDtypeStruct((batch_p, out_p), out_dtype),
        grid=grid,
        in_specs=in_specs,
        out_specs=out_specs,
        compiler_params=pltpu.CompilerParams(
            dimension_semantics=("parallel",),      # v7x: shard batch over 2 TCs
            vmem_limit_bytes=vmem_limit,
        ),
    )(x_p, *params)

    # Slice off batch padding and padded logit lanes.
    return out_p_arr[:batch, :out_dim]


def _reference(x, weights, biases, negative_slope):
    h = x.astype(jnp.float32)
    for i, (w, b) in enumerate(zip(weights, biases)):
        h = h @ w.astype(jnp.float32) + b.astype(jnp.float32)
        if i < len(weights) - 1:
            h = jnp.where(h > 0, h, negative_slope * h)
    return jax.nn.softmax(h, axis=-1)


def _init_params(key, all_dims, dtype=jnp.float32):
    """Deterministic init mimicking torch.nn.Linear (uniform +/- 1/sqrt(in_dim))."""
    weights, biases = [], []
    for in_dim, out_dim in zip(all_dims[:-1], all_dims[1:]):
        key, kw, kb = jax.random.split(key, 3)
        bound = 1.0 / (in_dim ** 0.5)
        # Stored as (in_dim, out_dim) == transpose of PyTorch's (out_dim, in_dim).
        w = jax.random.uniform(kw, (in_dim, out_dim), dtype, -bound, bound)
        b = jax.random.uniform(kb, (out_dim,), dtype, -bound, bound)
        weights.append(w)
        biases.append(b)
    return weights, biases


if __name__ == "__main__":
    hyperparameters = {
        "input_dim": 32,
        "hidden_dims": [64, 48],
        "output_dim": 16,
        "negative_slope": 0.2,
    }
    batch = 8

    all_dims = [
        hyperparameters["input_dim"],
        *hyperparameters["hidden_dims"],
        hyperparameters["output_dim"],
    ]

    key = jax.random.PRNGKey(0)
    key, kx = jax.random.split(key)
    x = jax.random.normal(kx, (batch, hyperparameters["input_dim"]), jnp.float32)
    weights, biases = _init_params(key, all_dims)

    out = linear_model_forward(
        x, weights, biases, negative_slope=hyperparameters["negative_slope"]
    )
    out = jax.block_until_ready(out)

    # sanity: shape, softmax rows sum to ~1, and close to a pure-JAX f32 reference
    # (loose tolerances account for bf16 matmul operands + approx reciprocal).
    assert out.shape == (batch, hyperparameters["output_dim"])
    assert jnp.allclose(jnp.sum(out, axis=-1), 1.0, atol=1e-2)
    ref = _reference(x, weights, biases, hyperparameters["negative_slope"])
    assert jnp.allclose(out, ref, atol=3e-2)

    print("KERNEL_OK")
</pallas_src>

<mosaic_0001>
module attributes {stable_mosaic.version = 11 : i64} {
  func.func @_mlp_kernel(%arg0: i32, %arg1: memref<8x128xbf16, #tpu.memory_space<vmem>>, %arg2: memref<128x128xbf16, #tpu.memory_space<vmem>>, %arg3: memref<1x128xf32, #tpu.memory_space<vmem>>, %arg4: memref<128x128xbf16, #tpu.memory_space<vmem>>, %arg5: memref<1x128xf32, #tpu.memory_space<vmem>>, %arg6: memref<128x128xbf16, #tpu.memory_space<vmem>>, %arg7: memref<1x128xf32, #tpu.memory_space<vmem>>, %arg8: memref<8x128xf32, #tpu.memory_space<vmem>>) attributes {dimension_semantics = [#tpu.dimension_semantics<parallel>], iteration_bounds = array<i64: 1>, scalar_prefetch = 0 : i64, scratch_operands = 0 : i64, tpu.core_type = #tpu.core_type<tc>, window_params = [{transform_indices = @transform_0, window_bounds = array<i64: 8, 128>}, {pipeline_mode = #tpu.pipeline_mode<synchronous>, transform_indices = @transform_1, window_bounds = array<i64: 128, 128>}, {pipeline_mode = #tpu.pipeline_mode<synchronous>, transform_indices = @transform_2, window_bounds = array<i64: 1, 128>}, {pipeline_mode = #tpu.pipeline_mode<synchronous>, transform_indices = @transform_3, window_bounds = array<i64: 128, 128>}, {pipeline_mode = #tpu.pipeline_mode<synchronous>, transform_indices = @transform_4, window_bounds = array<i64: 1, 128>}, {pipeline_mode = #tpu.pipeline_mode<synchronous>, transform_indices = @transform_5, window_bounds = array<i64: 128, 128>}, {pipeline_mode = #tpu.pipeline_mode<synchronous>, transform_indices = @transform_6, window_bounds = array<i64: 1, 128>}, {transform_indices = @transform_7, window_bounds = array<i64: 8, 128>}]} {
    %c0 = arith.constant 0 : index
    %c0_0 = arith.constant 0 : index
    %0 = vector.load %arg1[%c0, %c0_0] : memref<8x128xbf16, #tpu.memory_space<vmem>>, vector<8x128xbf16>
    %c0_1 = arith.constant 0 : index
    %c0_2 = arith.constant 0 : index
    %1 = vector.load %arg2[%c0_1, %c0_2] : memref<128x128xbf16, #tpu.memory_space<vmem>>, vector<128x128xbf16>
    %c0_3 = arith.constant 0 : index
    %c0_4 = arith.constant 0 : index
    %2 = vector.load %arg3[%c0_3, %c0_4] : memref<1x128xf32, #tpu.memory_space<vmem>>, vector<1x128xf32>
    %cst = arith.constant dense<0.000000e+00> : vector<8x128xf32>
    %3 = tpu.matmul %0, %1, %cst {dimension_numbers = #tpu.dot_dimension_numbers<[1], [0], [0], [1], [0, 0, 1, 1], [], []>} : vector<8x128xbf16>, vector<128x128xbf16>, vector<8x128xf32> -> vector<8x128xf32>
    %4 = vector.broadcast %2 : vector<1x128xf32> to vector<8x128xf32>
    %5 = arith.addf %3, %4 : vector<8x128xf32>
    %cst_5 = arith.constant 0.000000e+00 : f32
    %6 = vector.broadcast %cst_5 : f32 to vector<8x128xf32>
    %7 = arith.cmpf ogt, %5, %6 : vector<8x128xf32>
    %cst_6 = arith.constant 2.000000e-01 : f32
    %8 = vector.broadcast %cst_6 : f32 to vector<8x128xf32>
    %9 = arith.mulf %8, %5 : vector<8x128xf32>
    %10 = arith.select %7, %5, %9 : vector<8x128xi1>, vector<8x128xf32>
    %11 = arith.truncf %10 : vector<8x128xf32> to vector<8x128xbf16>
    %c0_7 = arith.constant 0 : index
    %c0_8 = arith.constant 0 : index
    %12 = vector.load %arg4[%c0_7, %c0_8] : memref<128x128xbf16, #tpu.memory_space<vmem>>, vector<128x128xbf16>
    %c0_9 = arith.constant 0 : index
    %c0_10 = arith.constant 0 : index
    %13 = vector.load %arg5[%c0_9, %c0_10] : memref<1x128xf32, #tpu.memory_space<vmem>>, vector<1x128xf32>
    %cst_11 = arith.constant dense<0.000000e+00> : vector<8x128xf32>
    %14 = tpu.matmul %11, %12, %cst_11 {dimension_numbers = #tpu.dot_dimension_numbers<[1], [0], [0], [1], [0, 0, 1, 1], [], []>} : vector<8x128xbf16>, vector<128x128xbf16>, vector<8x128xf32> -> vector<8x128xf32>
    %15 = vector.broadcast %13 : vector<1x128xf32> to vector<8x128xf32>
    %16 = arith.addf %14, %15 : vector<8x128xf32>
    %cst_12 = arith.constant 0.000000e+00 : f32
    %17 = vector.broadcast %cst_12 : f32 to vector<8x128xf32>
    %18 = arith.cmpf ogt, %16, %17 : vector<8x128xf32>
    %cst_13 = arith.constant 2.000000e-01 : f32
    %19 = vector.broadcast %cst_13 : f32 to vector<8x128xf32>
    %20 = arith.mulf %19, %16 : vector<8x128xf32>
    %21 = arith.select %18, %16, %20 : vector<8x128xi1>, vector<8x128xf32>
    %22 = arith.truncf %21 : vector<8x128xf32> to vector<8x128xbf16>
    %c0_14 = arith.constant 0 : index
    %c0_15 = arith.constant 0 : index
    %23 = vector.load %arg6[%c0_14, %c0_15] : memref<128x128xbf16, #tpu.memory_space<vmem>>, vector<128x128xbf16>
    %c0_16 = arith.constant 0 : index
    %c0_17 = arith.constant 0 : index
    %24 = vector.load %arg7[%c0_16, %c0_17] : memref<1x128xf32, #tpu.memory_space<vmem>>, vector<1x128xf32>
    %cst_18 = arith.constant dense<0.000000e+00> : vector<8x128xf32>
    %25 = tpu.matmul %22, %23, %cst_18 {dimension_numbers = #tpu.dot_dimension_numbers<[1], [0], [0], [1], [0, 0, 1, 1], [], []>} : vector<8x128xbf16>, vector<128x128xbf16>, vector<8x128xf32> -> vector<8x128xf32>
    %26 = vector.broadcast %24 : vector<1x128xf32> to vector<8x128xf32>
    %27 = arith.addf %25, %26 : vector<8x128xf32>
    %cst_19 = arith.constant dense<0xFF800000> : vector<8xf32>
    %28 = vector.multi_reduction <maximumf>, %27, %cst_19 [1] : vector<8x128xf32> to vector<8xf32>
    %29 = vector.shape_cast %28 : vector<8xf32> to vector<8x1xf32>
    %30 = vector.broadcast %29 : vector<8x1xf32> to vector<8x128xf32>
    %31 = arith.subf %27, %30 : vector<8x128xf32>
    %32 = math.exp %31 : vector<8x128xf32>
    %cst_20 = arith.constant dense<0.000000e+00> : vector<8xf32>
    %33 = vector.multi_reduction <add>, %32, %cst_20 [1] : vector<8x128xf32> to vector<8xf32>
    %34 = vector.shape_cast %33 : vector<8xf32> to vector<8x1xf32>
    %35 = tpu.reciprocal %34 {approx = true} : vector<8x1xf32> -> vector<8x1xf32>
    %36 = vector.broadcast %35 : vector<8x1xf32> to vector<8x128xf32>
    %37 = arith.mulf %32, %36 : vector<8x128xf32>
    %c0_21 = arith.constant 0 : index
    %c0_22 = arith.constant 0 : index
    %38 = vector.load %arg8[%c0_21, %c0_22] : memref<8x128xf32, #tpu.memory_space<vmem>>, vector<8x128xf32>
    tpu.vector_store %arg8[%c0_21, %c0_22], %37 {strides = array<i32>} : memref<8x128xf32, #tpu.memory_space<vmem>>, vector<8x128xf32>,
    return
  }
  func.func @transform_0(%arg0: i32) -> (i32, i32) {
    %c0_i32 = arith.constant 0 : i32
    %c0_i32_0 = arith.constant 0 : i32
    return %arg0, %c0_i32 : i32, i32
  }
  func.func @transform_1(%arg0: i32) -> (i32, i32) {
    %c0_i32 = arith.constant 0 : i32
    %c0_i32_0 = arith.constant 0 : i32
    %c0_i32_1 = arith.constant 0 : i32
    return %c0_i32, %c0_i32_0 : i32, i32
  }
  func.func @transform_2(%arg0: i32) -> (i32, i32) {
    %c0_i32 = arith.constant 0 : i32
    %c0_i32_0 = arith.constant 0 : i32
    %c0_i32_1 = arith.constant 0 : i32
    return %c0_i32, %c0_i32_0 : i32, i32
  }
  func.func @transform_3(%arg0: i32) -> (i32, i32) {
    %c0_i32 = arith.constant 0 : i32
    %c0_i32_0 = arith.constant 0 : i32
    %c0_i32_1 = arith.constant 0 : i32
    return %c0_i32, %c0_i32_0 : i32, i32
  }
  func.func @transform_4(%arg0: i32) -> (i32, i32) {
    %c0_i32 = arith.constant 0 : i32
    %c0_i32_0 = arith.constant 0 : i32
    %c0_i32_1 = arith.constant 0 : i32
    return %c0_i32, %c0_i32_0 : i32, i32
  }
  func.func @transform_5(%arg0: i32) -> (i32, i32) {
    %c0_i32 = arith.constant 0 : i32
    %c0_i32_0 = arith.constant 0 : i32
    %c0_i32_1 = arith.constant 0 : i32
    return %c0_i32, %c0_i32_0 : i32, i32
  }
  func.func @transform_6(%arg0: i32) -> (i32, i32) {
    %c0_i32 = arith.constant 0 : i32
    %c0_i32_0 = arith.constant 0 : i32
    %c0_i32_1 = arith.constant 0 : i32
    return %c0_i32, %c0_i32_0 : i32, i32
  }
  func.func @transform_7(%arg0: i32) -> (i32, i32) {
    %c0_i32 = arith.constant 0 : i32
    %c0_i32_0 = arith.constant 0 : i32
    return %arg0, %c0_i32 : i32, i32
  }
}

</mosaic_0001>

<llo_original>
// kernel: tpu_custom_call.1
$region0: #{tpu_custom_call.1}
  #allocation0 [shape = 'u32[]', space=smem, size = 0x4, offset = 0x4, fixed_abs, tag = 'smem constant byte address 0x4 - core index']
  #allocation1 [shape = 'u32[144,128]{1,0:T(1,128)}', space=vmem, size = 0x12000, scoped, tag = 'internal scratch']
  %s0 = inlined_call_operand.hbm [shape: bf16[8,128], index: 0, kind: input, shape index: {}]
  %s1 = inlined_call_operand.hbm [shape: bf16[128,128], index: 1, kind: input, shape index: {}]
  %s2 = inlined_call_operand.vmem [shape: f32[1,128], index: 2, kind: input, shape index: {}]
  %s3 = inlined_call_operand.hbm [shape: bf16[128,128], index: 3, kind: input, shape index: {}]
  %s4 = inlined_call_operand.vmem [shape: f32[1,128], index: 4, kind: input, shape index: {}]
  %s5 = inlined_call_operand.hbm [shape: bf16[128,128], index: 5, kind: input, shape index: {}]
  %s6 = inlined_call_operand.vmem [shape: f32[1,128], index: 6, kind: input, shape index: {}]
  %s7 = inlined_call_operand.hbm [shape: f32[8,128], index: 7, kind: output, shape index: {}]
  %s8 = sld [smem:[#allocation0]]
  $region54: #{tpu_custom_call.1} parent=0
    _
  %s10 = ssub.s32 1, %s8
  %s11 = scalar_select 0, %s10, %s8
  $region1: #{tpu_custom_call.1} parent=0
    #allocation2 [shape = 'u8[2048]{0}', space=vmem, size = 0x800, scoped, tag = 'input window, operand 0, single buffered']
    #allocation3 [shape = 's32[1]{0}', space=sflag, size = 0x4, scoped, tag = 'scoped memory for tpu_custom_call.1']
    #allocation4 [shape = 's32[1]{0}', space=sflag, size = 0x4, scoped, tag = 'scoped memory for tpu_custom_call.1']
    #allocation5 [shape = 'u8[32768]{0}', space=vmem, size = 0x8000, scoped, tag = 'input window, operand 1, single buffered']
    #allocation6 [shape = 's32[1]{0}', space=sflag, size = 0x4, scoped, tag = 'scoped memory for tpu_custom_call.1']
    #allocation7 [shape = 'u8[32768]{0}', space=vmem, size = 0x8000, scoped, tag = 'input window, operand 3, single buffered']
    #allocation8 [shape = 'u8[32768]{0}', space=vmem, size = 0x8000, scoped, tag = 'input window, operand 5, single buffered']
    #allocation9 [shape = 's32[1]{0}', space=sflag, size = 0x4, scoped, tag = 'scoped memory for tpu_custom_call.1']
    #allocation10 [shape = 'u8[4096]{0}', space=vmem, size = 0x1000, scoped, tag = 'output window, operand 0, single buffered']
    %12 = vsyncpa [#allocation3], 0
    %13 = vsyncpa [#allocation6], 0
    %14 = vsyncpa [#allocation9], 0
    %15 = vsyncpa [#allocation4], 0
    // Predicated region
    $region2: #{tpu_custom_call.1} parent=1 // pred_check
      _
    $region3: #{tpu_custom_call.1} parent=1 // pred_check_branch
      %17 = sbr.rel (0) target = $region5
    $region4: #{tpu_custom_call.1} parent=1 // pred_region
      %s19 = ssub.s32 64, 64
      %20 = vsyncadd [#allocation3], %s19
      %s22 = sshll.u32 [#allocation2], 4
      %s23 = int_to_ptr.vmem [resolvable:$true] %s22
      %25 = dma.hbm_to_vmem [thread:$0]  %s0, 64, %s23, [#allocation3]
    $region5: #{tpu_custom_call.1} parent=1 // pred_fallthru
      _
    // Predicated region
    $region6: #{tpu_custom_call.1} parent=1 // pred_check
      _
    $region7: #{tpu_custom_call.1} parent=1 // pred_check_branch
      %27 = sbr.rel (0) target = $region9
    $region8: #{tpu_custom_call.1} parent=1 // pred_region
      %s29 = ssub.s32 1024, 1024
      %30 = vsyncadd [#allocation6], %s29
      %s31 = sshll.u32 [#allocation5], 4
      %s32 = int_to_ptr.vmem [resolvable:$true] %s31
      %37 = dma.hbm_to_vmem [thread:$0]  %s1, 1024, %s32, [#allocation6], 64, 64, 4
    $region9: #{tpu_custom_call.1} parent=1 // pred_fallthru
      _
    // Predicated region
    $region10: #{tpu_custom_call.1} parent=1 // pred_check
      _
    $region11: #{tpu_custom_call.1} parent=1 // pred_check_branch
      %39 = sbr.rel (0) target = $region13
    $region12: #{tpu_custom_call.1} parent=1 // pred_region
      _
    $region13: #{tpu_custom_call.1} parent=1 // pred_fallthru
      _
    // Predicated region
    $region14: #{tpu_custom_call.1} parent=1 // pred_check
      _
    $region15: #{tpu_custom_call.1} parent=1 // pred_check_branch
      %41 = sbr.rel (0) target = $region17
    $region16: #{tpu_custom_call.1} parent=1 // pred_region
      %s43 = ssub.s32 1024, 1024
      %44 = vsyncadd [#allocation6], %s43
      %s45 = sshll.u32 [#allocation7], 4
      %s46 = int_to_ptr.vmem [resolvable:$true] %s45
      %51 = dma.hbm_to_vmem [thread:$0]  %s3, 1024, %s46, [#allocation6], 64, 64, 4
    $region17: #{tpu_custom_call.1} parent=1 // pred_fallthru
      _
    // Predicated region
    $region18: #{tpu_custom_call.1} parent=1 // pred_check
      _
    $region19: #{tpu_custom_call.1} parent=1 // pred_check_branch
      %53 = sbr.rel (0) target = $region21
    $region20: #{tpu_custom_call.1} parent=1 // pred_region
      _
    $region21: #{tpu_custom_call.1} parent=1 // pred_fallthru
      _
    // Predicated region
    $region22: #{tpu_custom_call.1} parent=1 // pred_check
      _
    $region23: #{tpu_custom_call.1} parent=1 // pred_check_branch
      %55 = sbr.rel (0) target = $region25
    $region24: #{tpu_custom_call.1} parent=1 // pred_region
      %s57 = ssub.s32 1024, 1024
      %58 = vsyncadd [#allocation9], %s57
      %s59 = sshll.u32 [#allocation8], 4
      %s60 = int_to_ptr.vmem [resolvable:$true] %s59
      %65 = dma.hbm_to_vmem [thread:$0]  %s5, 1024, %s60, [#allocation9], 64, 64, 4
    $region25: #{tpu_custom_call.1} parent=1 // pred_fallthru
      _
    // Predicated region
    $region26: #{tpu_custom_call.1} parent=1 // pred_check
      _
    $region27: #{tpu_custom_call.1} parent=1 // pred_check_branch
      %67 = sbr.rel (0) target = $region29
    $region28: #{tpu_custom_call.1} parent=1 // pred_region
      _
    $region29: #{tpu_custom_call.1} parent=1 // pred_fallthru
      _
    // Predicated region
    $region30: #{tpu_custom_call.1} parent=1 // pred_check
      _
    $region31: #{tpu_custom_call.1} parent=1 // pred_check_branch
      %69 = sbr.rel (0) target = $region33
    $region32: #{tpu_custom_call.1} parent=1 // pred_region
      %70 = dma.done [#allocation3], 64
    $region33: #{tpu_custom_call.1} parent=1 // pred_fallthru
      _
    // Predicated region
    $region34: #{tpu_custom_call.1} parent=1 // pred_check
      _
    $region35: #{tpu_custom_call.1} parent=1 // pred_check_branch
      %72 = sbr.rel (0) target = $region37
    $region36: #{tpu_custom_call.1} parent=1 // pred_region
      %73 = dma.done [#allocation6], 1024
    $region37: #{tpu_custom_call.1} parent=1 // pred_fallthru
      _
    // Predicated region
    $region38: #{tpu_custom_call.1} parent=1 // pred_check
      _
    $region39: #{tpu_custom_call.1} parent=1 // pred_check_branch
      %75 = sbr.rel (0) target = $region41
    $region40: #{tpu_custom_call.1} parent=1 // pred_region
      %76 = dma.done [#allocation6], 1024
    $region41: #{tpu_custom_call.1} parent=1 // pred_fallthru
      _
    // Predicated region
    $region42: #{tpu_custom_call.1} parent=1 // pred_check
      _
    $region43: #{tpu_custom_call.1} parent=1 // pred_check_branch
      %78 = sbr.rel (0) target = $region45
    $region44: #{tpu_custom_call.1} parent=1 // pred_region
      %79 = dma.done [#allocation9], 1024
    $region45: #{tpu_custom_call.1} parent=1 // pred_fallthru
      _
    %v81 = vld [vmem:[#allocation2] sm:$0xf]
    %v82 = vld [vmem:[#allocation5] sm:$0xf]
    %v83 = vld [vmem:[#allocation5 + $0x4] sm:$0xf]
    %v84 = vld [vmem:[#allocation5 + $0x8] sm:$0xf]
    %v85 = vld [vmem:[#allocation5 + $0xc] sm:$0xf]
    %v86 = vld [vmem:[#allocation5 + $0x10] sm:$0xf]
    %v87 = vld [vmem:[#allocation5 + $0x14] sm:$0xf]
    %v88 = vld [vmem:[#allocation5 + $0x18] sm:$0xf]
    %v89 = vld [vmem:[#allocation5 + $0x1c] sm:$0xf]
    %v90 = vld [vmem:[#allocation5 + $0x20] sm:$0xf]
    %v91 = vld [vmem:[#allocation5 + $0x24] sm:$0xf]
    %v92 = vld [vmem:[#allocation5 + $0x28] sm:$0xf]
    %v93 = vld [vmem:[#allocation5 + $0x2c] sm:$0xf]
    %v94 = vld [vmem:[#allocation5 + $0x30] sm:$0xf]
    %v95 = vld [vmem:[#allocation5 + $0x34] sm:$0xf]
    %v96 = vld [vmem:[#allocation5 + $0x38] sm:$0xf]
    %v97 = vld [vmem:[#allocation5 + $0x3c] sm:$0xf]
    %v98 = vld [vmem:[%s2] sm:$0x1]
    %v100 = vlaneseq
    %v101 = vshrl.u32 %v100, 7
    %v102 = vsub.s32 0, %v101
    %v103 = vrot.slane %v98, %v102
    %v121 = vunpack.c.l.b16 %v82
    %v122 = vunpack.c.l.b16 %v83
    %v123 = vunpack.c.l.b16 %v84
    %v124 = vunpack.c.l.b16 %v85
    %v125 = vunpack.c.l.b16 %v86
    %v126 = vunpack.c.l.b16 %v87
    %v127 = vunpack.c.l.b16 %v88
    %v128 = vunpack.c.l.b16 %v89
    %v129 = vunpack.c.l.b16 %v90
    %v130 = vunpack.c.l.b16 %v91
    %v131 = vunpack.c.l.b16 %v92
    %v132 = vunpack.c.l.b16 %v93
    %v133 = vunpack.c.l.b16 %v94
    %v134 = vunpack.c.l.b16 %v95
    %v135 = vunpack.c.l.b16 %v96
    %v136 = vunpack.c.l.b16 %v97
    %v137 = vpack.c.b16 %v122, %v121
    %v138 = vpack.c.b16 %v124, %v123
    %v139 = vpack.c.b16 %v126, %v125
    %v140 = vpack.c.b16 %v128, %v127
    %v141 = vpack.c.b16 %v130, %v129
    %v142 = vpack.c.b16 %v132, %v131
    %v143 = vpack.c.b16 %v134, %v133
    %v144 = vpack.c.b16 %v136, %v135
    %153 = vmatprep.subr.bf16.mxu0 0
    %154 = vmatpush1.bf16.msra.mxu0 %v137
    %155 = vmatprep.subr.bf16.mxu0 0
    %156 = vmatpush1.bf16.msra.mxu0 %v138
    %157 = vmatprep.subr.bf16.mxu0 0
    %158 = vmatpush1.bf16.msra.mxu0 %v139
    %159 = vmatprep.subr.bf16.mxu0 0
    %160 = vmatpush1.bf16.msra.mxu0 %v140
    %161 = vmatprep.subr.bf16.mxu0 0
    %162 = vmatpush1.bf16.msra.mxu0 %v141
    %163 = vmatprep.subr.bf16.mxu0 0
    %164 = vmatpush1.bf16.msra.mxu0 %v142
    %165 = vmatprep.subr.bf16.mxu0 0
    %166 = vmatpush1.bf16.msra.mxu0 %v143
    %167 = vmatprep.subr.bf16.mxu0 0
    %168 = vmatpush1.bf16.msra.mxu0 %v144
    %169 = vmatprep.subr.bf16.mxu0 0
    %170 = vmatpush1.bf16.msra.mxu0 0
    %171 = vmatprep.subr.bf16.mxu0 0
    %172 = vmatpush1.bf16.msra.mxu0 0
    %173 = vmatprep.subr.bf16.mxu0 0
    %174 = vmatpush1.bf16.msra.mxu0 0
    %175 = vmatprep.subr.bf16.mxu0 0
    %176 = vmatpush1.bf16.msra.mxu0 0
    %177 = vmatprep.subr.bf16.mxu0 0
    %178 = vmatpush1.bf16.msra.mxu0 0
    %179 = vmatprep.subr.bf16.mxu0 0
    %180 = vmatpush1.bf16.msra.mxu0 0
    %181 = vmatprep.subr.bf16.mxu0 0
    %182 = vmatpush1.bf16.msra.mxu0 0
    %183 = vmatprep.subr.bf16.mxu0 0
    %184 = vmatpush1.bf16.msra.mxu0 0
    %185 = vmatprep.mubr.bf16.mxu0 0
    %186 = vmatmul.mubr.bf16.gmra.mrb[0].mxu0 %v81
    %v187 = vpop.f32.mrb[0].mxu0
    %v188 = vadd.f32 %v103, %v187
    %v189 = vpop.f32.mrb[0].mxu0
    %v190 = vpop.f32.mrb[0].mxu0
    %v191 = vpop.f32.mrb[0].mxu0
    %192 = vdwg.mxu0
    %vm193 = vcmp.gt.f32.partialorder %v188, 0.0
    %v194 = vmul.f32 %v188, 0.2
    %v195 = vsel %vm193, %v188, %v194
    %v196 = vpack.c.bf16 %v195, %v195
    %v197 = vld [vmem:[#allocation7] sm:$0xf]
    %v198 = vld [vmem:[#allocation7 + $0x4] sm:$0xf]
    %v199 = vld [vmem:[#allocation7 + $0x8] sm:$0xf]
    %v200 = vld [vmem:[#allocation7 + $0xc] sm:$0xf]
    %v201 = vld [vmem:[#allocation7 + $0x10] sm:$0xf]
    %v202 = vld [vmem:[#allocation7 + $0x14] sm:$0xf]
    %v203 = vld [vmem:[#allocation7 + $0x18] sm:$0xf]
    %v204 = vld [vmem:[#allocation7 + $0x1c] sm:$0xf]
    %v205 = vld [vmem:[#allocation7 + $0x20] sm:$0xf]
    %v206 = vld [vmem:[#allocation7 + $0x24] sm:$0xf]
    %v207 = vld [vmem:[#allocation7 + $0x28] sm:$0xf]
    %v208 = vld [vmem:[#allocation7 + $0x2c] sm:$0xf]
    %v209 = vld [vmem:[#allocation7 + $0x30] sm:$0xf]
    %v210 = vld [vmem:[#allocation7 + $0x34] sm:$0xf]
    %v211 = vld [vmem:[#allocation7 + $0x38] sm:$0xf]
    %v212 = vld [vmem:[#allocation7 + $0x3c] sm:$0xf]
    %v213 = vld [vmem:[%s4] sm:$0x1]
    %v215 = vlaneseq
    %v216 = vshrl.u32 %v215, 7
    %v217 = vsub.s32 0, %v216
    %v218 = vrot.slane %v213, %v217
    %v236 = vunpack.c.l.b16 %v197
    %v237 = vunpack.c.l.b16 %v198
    %v238 = vunpack.c.l.b16 %v199
    %v239 = vunpack.c.l.b16 %v200
    %v240 = vunpack.c.l.b16 %v201
    %v241 = vunpack.c.l.b16 %v202
    %v242 = vunpack.c.l.b16 %v203
    %v243 = vunpack.c.l.b16 %v204
    %v244 = vunpack.c.l.b16 %v205
    %v245 = vunpack.c.l.b16 %v206
    %v246 = vunpack.c.l.b16 %v207
    %v247 = vunpack.c.l.b16 %v208
    %v248 = vunpack.c.l.b16 %v209
    %v249 = vunpack.c.l.b16 %v210
    %v250 = vunpack.c.l.b16 %v211
    %v251 = vunpack.c.l.b16 %v212
    %v252 = vpack.c.b16 %v237, %v236
    %v253 = vpack.c.b16 %v239, %v238
    %v254 = vpack.c.b16 %v241, %v240
    %v255 = vpack.c.b16 %v243, %v242
    %v256 = vpack.c.b16 %v245, %v244
    %v257 = vpack.c.b16 %v247, %v246
    %v258 = vpack.c.b16 %v249, %v248
    %v259 = vpack.c.b16 %v251, %v250
    %268 = vmatprep.subr.bf16.mxu0 0
    %269 = vmatpush1.bf16.msra.mxu0 %v252
    %270 = vmatprep.subr.bf16.mxu0 0
    %271 = vmatpush1.bf16.msra.mxu0 %v253
    %272 = vmatprep.subr.bf16.mxu0 0
    %273 = vmatpush1.bf16.msra.mxu0 %v254
    %274 = vmatprep.subr.bf16.mxu0 0
    %275 = vmatpush1.bf16.msra.mxu0 %v255
    %276 = vmatprep.subr.bf16.mxu0 0
    %277 = vmatpush1.bf16.msra.mxu0 %v256
    %278 = vmatprep.subr.bf16.mxu0 0
    %279 = vmatpush1.bf16.msra.mxu0 %v257
    %280 = vmatprep.subr.bf16.mxu0 0
    %281 = vmatpush1.bf16.msra.mxu0 %v258
    %282 = vmatprep.subr.bf16.mxu0 0
    %283 = vmatpush1.bf16.msra.mxu0 %v259
    %284 = vmatprep.subr.bf16.mxu0 0
    %285 = vmatpush1.bf16.msra.mxu0 0
    %286 = vmatprep.subr.bf16.mxu0 0
    %287 = vmatpush1.bf16.msra.mxu0 0
    %288 = vmatprep.subr.bf16.mxu0 0
    %289 = vmatpush1.bf16.msra.mxu0 0
    %290 = vmatprep.subr.bf16.mxu0 0
    %291 = vmatpush1.bf16.msra.mxu0 0
    %292 = vmatprep.subr.bf16.mxu0 0
    %293 = vmatpush1.bf16.msra.mxu0 0
    %294 = vmatprep.subr.bf16.mxu0 0
    %295 = vmatpush1.bf16.msra.mxu0 0
    %296 = vmatprep.subr.bf16.mxu0 0
    %297 = vmatpush1.bf16.msra.mxu0 0
    %298 = vmatprep.subr.bf16.mxu0 0
    %299 = vmatpush1.bf16.msra.mxu0 0
    %300 = vmatprep.mubr.bf16.mxu0 0
    %301 = vmatmul.mubr.bf16.gmra.mrb[0].mxu0 %v196
    %v302 = vpop.f32.mrb[0].mxu0
    %v303 = vadd.f32 %v218, %v302
    %v304 = vpop.f32.mrb[0].mxu0
    %v305 = vpop.f32.mrb[0].mxu0
    %v306 = vpop.f32.mrb[0].mxu0
    %307 = vdwg.mxu0
    %vm308 = vcmp.gt.f32.partialorder %v303, 0.0
    %v309 = vmul.f32 %v303, 0.2
    %v310 = vsel %vm308, %v303, %v309
    %v311 = vpack.c.bf16 %v310, %v310
    %v312 = vld [vmem:[#allocation8] sm:$0xf]
    %v313 = vld [vmem:[#allocation8 + $0x4] sm:$0xf]
    %v314 = vld [vmem:[#allocation8 + $0x8] sm:$0xf]
    %v315 = vld [vmem:[#allocation8 + $0xc] sm:$0xf]
    %v316 = vld [vmem:[#allocation8 + $0x10] sm:$0xf]
    %v317 = vld [vmem:[#allocation8 + $0x14] sm:$0xf]
    %v318 = vld [vmem:[#allocation8 + $0x18] sm:$0xf]
    %v319 = vld [vmem:[#allocation8 + $0x1c] sm:$0xf]
    %v320 = vld [vmem:[#allocation8 + $0x20] sm:$0xf]
    %v321 = vld [vmem:[#allocation8 + $0x24] sm:$0xf]
    %v322 = vld [vmem:[#allocation8 + $0x28] sm:$0xf]
    %v323 = vld [vmem:[#allocation8 + $0x2c] sm:$0xf]
    %v324 = vld [vmem:[#allocation8 + $0x30] sm:$0xf]
    %v325 = vld [vmem:[#allocation8 + $0x34] sm:$0xf]
    %v326 = vld [vmem:[#allocation8 + $0x38] sm:$0xf]
    %v327 = vld [vmem:[#allocation8 + $0x3c] sm:$0xf]
    %v328 = vld [vmem:[%s6] sm:$0x1]
    %v330 = vlaneseq
    %v331 = vshrl.u32 %v330, 7
    %v332 = vsub.s32 0, %v331
    %v333 = vrot.slane %v328, %v332
    %v351 = vunpack.c.l.b16 %v312
    %v352 = vunpack.c.l.b16 %v313
    %v353 = vunpack.c.l.b16 %v314
    %v354 = vunpack.c.l.b16 %v315
    %v355 = vunpack.c.l.b16 %v316
    %v356 = vunpack.c.l.b16 %v317
    %v357 = vunpack.c.l.b16 %v318
    %v358 = vunpack.c.l.b16 %v319
    %v359 = vunpack.c.l.b16 %v320
    %v360 = vunpack.c.l.b16 %v321
    %v361 = vunpack.c.l.b16 %v322
    %v362 = vunpack.c.l.b16 %v323
    %v363 = vunpack.c.l.b16 %v324
    %v364 = vunpack.c.l.b16 %v325
    %v365 = vunpack.c.l.b16 %v326
    %v366 = vunpack.c.l.b16 %v327
    %v367 = vpack.c.b16 %v352, %v351
    %v368 = vpack.c.b16 %v354, %v353
    %v369 = vpack.c.b16 %v356, %v355
    %v370 = vpack.c.b16 %v358, %v357
    %v371 = vpack.c.b16 %v360, %v359
    %v372 = vpack.c.b16 %v362, %v361
    %v373 = vpack.c.b16 %v364, %v363
    %v374 = vpack.c.b16 %v366, %v365
    %383 = vmatprep.subr.bf16.mxu0 0
    %384 = vmatpush1.bf16.msra.mxu0 %v367
    %385 = vmatprep.subr.bf16.mxu0 0
    %386 = vmatpush1.bf16.msra.mxu0 %v368
    %387 = vmatprep.subr.bf16.mxu0 0
    %388 = vmatpush1.bf16.msra.mxu0 %v369
    %389 = vmatprep.subr.bf16.mxu0 0
    %390 = vmatpush1.bf16.msra.mxu0 %v370
    %391 = vmatprep.subr.bf16.mxu0 0
    %392 = vmatpush1.bf16.msra.mxu0 %v371
    %393 = vmatprep.subr.bf16.mxu0 0
    %394 = vmatpush1.bf16.msra.mxu0 %v372
    %395 = vmatprep.subr.bf16.mxu0 0
    %396 = vmatpush1.bf16.msra.mxu0 %v373
    %397 = vmatprep.subr.bf16.mxu0 0
    %398 = vmatpush1.bf16.msra.mxu0 %v374
    %399 = vmatprep.subr.bf16.mxu0 0
    %400 = vmatpush1.bf16.msra.mxu0 0
    %401 = vmatprep.subr.bf16.mxu0 0
    %402 = vmatpush1.bf16.msra.mxu0 0
    %403 = vmatprep.subr.bf16.mxu0 0
    %404 = vmatpush1.bf16.msra.mxu0 0
    %405 = vmatprep.subr.bf16.mxu0 0
    %406 = vmatpush1.bf16.msra.mxu0 0
    %407 = vmatprep.subr.bf16.mxu0 0
    %408 = vmatpush1.bf16.msra.mxu0 0
    %409 = vmatprep.subr.bf16.mxu0 0
    %410 = vmatpush1.bf16.msra.mxu0 0
    %411 = vmatprep.subr.bf16.mxu0 0
    %412 = vmatpush1.bf16.msra.mxu0 0
    %413 = vmatprep.subr.bf16.mxu0 0
    %414 = vmatpush1.bf16.msra.mxu0 0
    %415 = vmatprep.mubr.bf16.mxu0 0
    %416 = vmatmul.mubr.bf16.gmra.mrb[0].mxu0 %v311
    %v417 = vpop.f32.mrb[0].mxu0
    %v418 = vadd.f32 %v333, %v417
    %v419 = vpop.f32.mrb[0].mxu0
    %v420 = vpop.f32.mrb[0].mxu0
    %v421 = vpop.f32.mrb[0].mxu0
    %422 = vdwg.mxu0
    %423 = vmax.xlane.f32.xlu0 %v418
    %v424 = vpop.xlane.xlu0 %423
    %v425 = vsub.f32 %v418, %v424
    %v426 = vmul.f32 %v425, 1.442695
    %v427 = vpow.pop %v426
    %428 = vadd.xlane.f32.xlu0 %v427
    %v429 = vpop.xlane.xlu0 %428
    %v430 = vrcp.pop %v429
    %v431 = vmul.f32 %v427, %v430
    %432 = vst [vmem:[#allocation10] sm:$0xff] %v431
    // Predicated region
    $region46: #{tpu_custom_call.1} parent=1 // pred_check
      _
    $region47: #{tpu_custom_call.1} parent=1 // pred_check_branch
      %434 = sbr.rel (0) target = $region49
    $region48: #{tpu_custom_call.1} parent=1 // pred_region
      %s436 = ssub.s32 128, 128
      %437 = vsyncadd [#allocation4], %s436
      %s439 = sshll.u32 [#allocation10], 4
      %s440 = int_to_ptr.vmem [resolvable:$true] %s439
      %442 = dma.vmem_to_hbm [thread:$0]  %s440, 128, %s7, [#allocation4]
    $region49: #{tpu_custom_call.1} parent=1 // pred_fallthru
      _
    // Predicated region
    $region50: #{tpu_custom_call.1} parent=1 // pred_check
      _
    $region51: #{tpu_custom_call.1} parent=1 // pred_check_branch
      %444 = sbr.rel (0) target = $region53
    $region52: #{tpu_custom_call.1} parent=1 // pred_region
      %445 = dma.done [#allocation4], 128
    $region53: #{tpu_custom_call.1} parent=1 // pred_fallthru
      _
    %446 = vsyncpa [#allocation3], 1
    %447 = vsyncpa [#allocation6], 1
    %448 = vsyncpa [#allocation9], 1
    %449 = vsyncpa [#allocation4], 1

</llo_original>
